<compile_context>
chip_gen: v6e
topology: v6e:2x2x1
jax: 0.10.0
libtpu: 0.0.40
codegen_flags: <defaults>
</compile_context>

<pallas_src>
import jax
import jax.numpy as jnp
from jax.experimental import pallas as pl
from jax.experimental.pallas import tpu as pltpu

EPS = 1e-5


def bn_relu_kernel(x_ref, gamma_ref, beta_ref, o_ref):
    # x_ref: (C, M) with C = channels (sublanes), M = N*H*W (lanes)
    x = x_ref[...].astype(jnp.float32)                      # (C, M)
    m = x.shape[-1]
    inv_m = jnp.float32(1.0 / m)

    # One-pass batch statistics per channel (biased variance, matching PyTorch
    # training-mode BatchNorm2d normalization): var = E[x^2] - mean^2.
    mean = jnp.sum(x, axis=-1, keepdims=True) * inv_m       # (C, 1)
    ex2 = jnp.sum(x * x, axis=-1, keepdims=True) * inv_m    # (C, 1)
    var = ex2 - mean * mean                                  # (C, 1)

    inv_std = jax.lax.rsqrt(var + EPS)                       # (C, 1)
    gamma = gamma_ref[...].astype(jnp.float32)               # (C, 1)
    beta = beta_ref[...].astype(jnp.float32)                 # (C, 1)

    # Fold normalize + affine into one scale/shift pair per channel, applied as a
    # single fused mul-add over the data tile (broadcast across lanes).
    scale = inv_std * gamma                                  # (C, 1)
    shift = beta - mean * scale                              # (C, 1)

    y = x * scale + shift                                    # (C, M)
    o_ref[...] = jnp.maximum(y, 0.0).astype(o_ref.dtype)     # ReLU


def batchnorm_relu(x_nchw, gamma, beta):
    """x_nchw: (N, C, H, W) float32 with N == 1. gamma/beta: (C,) float32."""
    n, c, h, w = x_nchw.shape
    # N == 1 in this module, so NCHW -> (C, H*W) is a pure reshape (no transpose).
    assert n == 1, "kernel specialized for N=1 (as in the reference module)"
    m = n * h * w

    x2d = x_nchw.reshape(c, m)          # free reshape, channels on sublanes
    gamma2d = gamma.reshape(c, 1)
    beta2d = beta.reshape(c, 1)

    vmem = pl.BlockSpec(memory_space=pltpu.MemorySpace.VMEM)

    out2d = pl.pallas_call(
        bn_relu_kernel,
        out_shape=jax.ShapeDtypeStruct((c, m), x2d.dtype),
        in_specs=[vmem, vmem, vmem],
        out_specs=vmem,
    )(x2d, gamma2d, beta2d)

    # (C, H*W) -> NCHW: also a free reshape for N == 1.
    return out2d.reshape(n, c, h, w)


def reference(x_nchw, gamma, beta):
    # Pure-JAX reference of training-mode BatchNorm2d + ReLU.
    mean = jnp.mean(x_nchw, axis=(0, 2, 3), keepdims=True)
    var = jnp.mean((x_nchw - mean) ** 2, axis=(0, 2, 3), keepdims=True)
    y = (x_nchw - mean) / jnp.sqrt(var + EPS)
    y = y * gamma.reshape(1, -1, 1, 1) + beta.reshape(1, -1, 1, 1)
    return jnp.maximum(y, 0.0)


if __name__ == "__main__":
    key = jax.random.PRNGKey(0)
    kx, kg, kb = jax.random.split(key, 3)

    N, C, H, W = 1, 128, 14, 14
    x = jax.random.normal(kx, (N, C, H, W), dtype=jnp.float32)
    # PyTorch default init is weight=1, bias=0; perturb slightly so the affine
    # path is exercised.
    gamma = 1.0 + 0.1 * jax.random.normal(kg, (C,), dtype=jnp.float32)
    beta = 0.1 * jax.random.normal(kb, (C,), dtype=jnp.float32)

    # TODO(synk): running_mean/running_var updates (track_running_stats) are not
    # produced; only the forward output is computed, matching the module's return.
    out = batchnorm_relu(x, gamma, beta)
    out = jax.block_until_ready(out)

    ref = reference(x, gamma, beta)
    assert out.shape == (N, C, H, W)
    assert jnp.allclose(out, ref, atol=1e-5, rtol=1e-5), float(jnp.max(jnp.abs(out - ref)))

    print("KERNEL_OK")
</pallas_src>

<mosaic_0001>
module attributes {stable_mosaic.version = 11 : i64} {
  func.func @bn_relu_kernel(%arg0: memref<128x196xf32, #tpu.memory_space<vmem>>, %arg1: memref<128x1xf32, #tpu.memory_space<vmem>>, %arg2: memref<128x1xf32, #tpu.memory_space<vmem>>, %arg3: memref<128x196xf32, #tpu.memory_space<vmem>>) attributes {dimension_semantics = [], scalar_prefetch = 0 : i64, scratch_operands = 0 : i64, tpu.core_type = #tpu.core_type<tc>} {
    %c0 = arith.constant 0 : index
    %c0_0 = arith.constant 0 : index
    %0 = vector.load %arg0[%c0, %c0_0] : memref<128x196xf32, #tpu.memory_space<vmem>>, vector<128x196xf32>
    %cst = arith.constant dense<0.000000e+00> : vector<128xf32>
    %1 = vector.multi_reduction <add>, %0, %cst [1] : vector<128x196xf32> to vector<128xf32>
    %2 = vector.shape_cast %1 : vector<128xf32> to vector<128x1xf32>
    %cst_1 = arith.constant 0.00510204071 : f32
    %3 = vector.broadcast %cst_1 : f32 to vector<128x1xf32>
    %4 = arith.mulf %2, %3 : vector<128x1xf32>
    %5 = arith.mulf %0, %0 : vector<128x196xf32>
    %cst_2 = arith.constant dense<0.000000e+00> : vector<128xf32>
    %6 = vector.multi_reduction <add>, %5, %cst_2 [1] : vector<128x196xf32> to vector<128xf32>
    %7 = vector.shape_cast %6 : vector<128xf32> to vector<128x1xf32>
    %cst_3 = arith.constant 0.00510204071 : f32
    %8 = vector.broadcast %cst_3 : f32 to vector<128x1xf32>
    %9 = arith.mulf %7, %8 : vector<128x1xf32>
    %10 = arith.mulf %4, %4 : vector<128x1xf32>
    %11 = arith.subf %9, %10 : vector<128x1xf32>
    %cst_4 = arith.constant 9.99999974E-6 : f32
    %12 = vector.broadcast %cst_4 : f32 to vector<128x1xf32>
    %13 = arith.addf %11, %12 : vector<128x1xf32>
    %14 = math.rsqrt %13 : vector<128x1xf32>
    %c0_5 = arith.constant 0 : index
    %c0_6 = arith.constant 0 : index
    %15 = vector.load %arg1[%c0_5, %c0_6] : memref<128x1xf32, #tpu.memory_space<vmem>>, vector<128x1xf32>
    %c0_7 = arith.constant 0 : index
    %c0_8 = arith.constant 0 : index
    %16 = vector.load %arg2[%c0_7, %c0_8] : memref<128x1xf32, #tpu.memory_space<vmem>>, vector<128x1xf32>
    %17 = arith.mulf %14, %15 : vector<128x1xf32>
    %18 = arith.mulf %4, %17 : vector<128x1xf32>
    %19 = arith.subf %16, %18 : vector<128x1xf32>
    %20 = vector.broadcast %17 : vector<128x1xf32> to vector<128x196xf32>
    %21 = arith.mulf %0, %20 : vector<128x196xf32>
    %22 = vector.broadcast %19 : vector<128x1xf32> to vector<128x196xf32>
    %23 = arith.addf %21, %22 : vector<128x196xf32>
    %cst_9 = arith.constant 0.000000e+00 : f32
    %24 = vector.broadcast %cst_9 : f32 to vector<128x196xf32>
    %25 = arith.maximumf %23, %24 : vector<128x196xf32>
    %c0_10 = arith.constant 0 : index
    %c0_11 = arith.constant 0 : index
    %26 = vector.load %arg3[%c0_10, %c0_11] : memref<128x196xf32, #tpu.memory_space<vmem>>, vector<128x196xf32>
    tpu.vector_store %arg3[%c0_10, %c0_11], %25 {strides = array<i32>} : memref<128x196xf32, #tpu.memory_space<vmem>>, vector<128x196xf32>,
    return
  }
}

</mosaic_0001>

<llo_original>
// kernel: tpu_custom_call.1
$region0: #{tpu_custom_call.1}
  #allocation0 [shape = 'u32[]', space=smem, size = 0x4, offset = 0x4, fixed_abs, tag = 'smem constant byte address 0x4 - core index']
  #allocation1 [shape = 'u32[144,128]{1,0:T(1,128)}', space=vmem, size = 0x12000, scoped, tag = 'internal scratch']
  %s0 = inlined_call_operand.vmem [shape: f32[128,196], index: 0, kind: input, shape index: {}]
  %s1 = inlined_call_operand.vmem [shape: f32[128,1], index: 1, kind: input, shape index: {}]
  %s2 = inlined_call_operand.vmem [shape: f32[128,1], index: 2, kind: input, shape index: {}]
  %s3 = inlined_call_operand.vmem [shape: f32[128,196], index: 3, kind: output, shape index: {}]
  %s4 = sld [smem:[#allocation0]]
  $region22: #{tpu_custom_call.1} parent=0
    _
  %s6 = ssub.s32 1, %s4
  %s7 = scalar_select 0, %s6, %s4
  // Predicated region
  $region2: #{tpu_custom_call.1} parent=0 // pred_check
    _
  $region3: #{tpu_custom_call.1} parent=0 // pred_check_branch
    %9 = sbr.rel (0) target = $region5
  $region4: #{tpu_custom_call.1} parent=0 // pred_region
    _
  $region5: #{tpu_custom_call.1} parent=0 // pred_fallthru
    _
  // Predicated region
  $region6: #{tpu_custom_call.1} parent=0 // pred_check
    _
  $region7: #{tpu_custom_call.1} parent=0 // pred_check_branch
    %11 = sbr.rel (0) target = $region9
  $region8: #{tpu_custom_call.1} parent=0 // pred_region
    _
  $region9: #{tpu_custom_call.1} parent=0 // pred_fallthru
    _
  // Predicated region
  $region10: #{tpu_custom_call.1} parent=0 // pred_check
    _
  $region11: #{tpu_custom_call.1} parent=0 // pred_check_branch
    %13 = sbr.rel (0) target = $region13
  $region12: #{tpu_custom_call.1} parent=0 // pred_region
    _
  $region13: #{tpu_custom_call.1} parent=0 // pred_fallthru
    _
  %v14 = vld [vmem:[%s0] sm:$0xff]
  %v15 = vld [vmem:[%s0 + $0x8] sm:$0xff]
  %v16 = vld [vmem:[%s0 + $0x10] sm:$0xff]
  %v17 = vld [vmem:[%s0 + $0x18] sm:$0xff]
  %v18 = vld [vmem:[%s0 + $0x20] sm:$0xff]
  %v19 = vld [vmem:[%s0 + $0x28] sm:$0xff]
  %v20 = vld [vmem:[%s0 + $0x30] sm:$0xff]
  %v21 = vld [vmem:[%s0 + $0x38] sm:$0xff]
  %v22 = vld [vmem:[%s0 + $0x40] sm:$0xff]
  %v23 = vld [vmem:[%s0 + $0x48] sm:$0xff]
  %v24 = vld [vmem:[%s0 + $0x50] sm:$0xff]
  %v25 = vld [vmem:[%s0 + $0x58] sm:$0xff]
  %v26 = vld [vmem:[%s0 + $0x60] sm:$0xff]
  %v27 = vld [vmem:[%s0 + $0x68] sm:$0xff]
  %v28 = vld [vmem:[%s0 + $0x70] sm:$0xff]
  %v29 = vld [vmem:[%s0 + $0x78] sm:$0xff]
  %v30 = vld [vmem:[%s0 + $0x80] sm:$0xff]
  %v31 = vld [vmem:[%s0 + $0x88] sm:$0xff]
  %v32 = vld [vmem:[%s0 + $0x90] sm:$0xff]
  %v33 = vld [vmem:[%s0 + $0x98] sm:$0xff]
  %v34 = vld [vmem:[%s0 + $0xa0] sm:$0xff]
  %v35 = vld [vmem:[%s0 + $0xa8] sm:$0xff]
  %v36 = vld [vmem:[%s0 + $0xb0] sm:$0xff]
  %v37 = vld [vmem:[%s0 + $0xb8] sm:$0xff]
  %v38 = vld [vmem:[%s0 + $0xc0] sm:$0xff]
  %v39 = vld [vmem:[%s0 + $0xc8] sm:$0xff]
  %v40 = vld [vmem:[%s0 + $0xd0] sm:$0xff]
  %v41 = vld [vmem:[%s0 + $0xd8] sm:$0xff]
  %v42 = vld [vmem:[%s0 + $0xe0] sm:$0xff]
  %v43 = vld [vmem:[%s0 + $0xe8] sm:$0xff]
  %v44 = vld [vmem:[%s0 + $0xf0] sm:$0xff]
  %v45 = vld [vmem:[%s0 + $0xf8] sm:$0xff]
  %vm46 = vcmask 556032
  %v47 = vsel %vm46, %v15, 0.0
  %v48 = vadd.f32 %v14, %v47
  %49 = vadd.xlane.f32.xlu0 %v48
  %v50 = vpop.xlane.xlu0 %49
  %v51 = vsel %vm46, %v17, 0.0
  %v52 = vadd.f32 %v16, %v51
  %53 = vadd.xlane.f32.xlu0 %v52
  %v54 = vpop.xlane.xlu0 %53
  %v55 = vsel %vm46, %v19, 0.0
  %v56 = vadd.f32 %v18, %v55
  %57 = vadd.xlane.f32.xlu0 %v56
  %v58 = vpop.xlane.xlu0 %57
  %v59 = vsel %vm46, %v21, 0.0
  %v60 = vadd.f32 %v20, %v59
  %61 = vadd.xlane.f32.xlu0 %v60
  %v62 = vpop.xlane.xlu0 %61
  %v63 = vsel %vm46, %v23, 0.0
  %v64 = vadd.f32 %v22, %v63
  %65 = vadd.xlane.f32.xlu0 %v64
  %v66 = vpop.xlane.xlu0 %65
  %v67 = vsel %vm46, %v25, 0.0
  %v68 = vadd.f32 %v24, %v67
  %69 = vadd.xlane.f32.xlu0 %v68
  %v70 = vpop.xlane.xlu0 %69
  %v71 = vsel %vm46, %v27, 0.0
  %v72 = vadd.f32 %v26, %v71
  %73 = vadd.xlane.f32.xlu0 %v72
  %v74 = vpop.xlane.xlu0 %73
  %v75 = vsel %vm46, %v29, 0.0
  %v76 = vadd.f32 %v28, %v75
  %77 = vadd.xlane.f32.xlu0 %v76
  %v78 = vpop.xlane.xlu0 %77
  %v79 = vsel %vm46, %v31, 0.0
  %v80 = vadd.f32 %v30, %v79
  %81 = vadd.xlane.f32.xlu0 %v80
  %v82 = vpop.xlane.xlu0 %81
  %v83 = vsel %vm46, %v33, 0.0
  %v84 = vadd.f32 %v32, %v83
  %85 = vadd.xlane.f32.xlu0 %v84
  %v86 = vpop.xlane.xlu0 %85
  %v87 = vsel %vm46, %v35, 0.0
  %v88 = vadd.f32 %v34, %v87
  %89 = vadd.xlane.f32.xlu0 %v88
  %v90 = vpop.xlane.xlu0 %89
  %v91 = vsel %vm46, %v37, 0.0
  %v92 = vadd.f32 %v36, %v91
  %93 = vadd.xlane.f32.xlu0 %v92
  %v94 = vpop.xlane.xlu0 %93
  %v95 = vsel %vm46, %v39, 0.0
  %v96 = vadd.f32 %v38, %v95
  %97 = vadd.xlane.f32.xlu0 %v96
  %v98 = vpop.xlane.xlu0 %97
  %v99 = vsel %vm46, %v41, 0.0
  %v100 = vadd.f32 %v40, %v99
  %101 = vadd.xlane.f32.xlu0 %v100
  %v102 = vpop.xlane.xlu0 %101
  %v103 = vsel %vm46, %v43, 0.0
  %v104 = vadd.f32 %v42, %v103
  %105 = vadd.xlane.f32.xlu0 %v104
  %v106 = vpop.xlane.xlu0 %105
  %v107 = vsel %vm46, %v45, 0.0
  %v108 = vadd.f32 %v44, %v107
  %109 = vadd.xlane.f32.xlu0 %v108
  %v110 = vpop.xlane.xlu0 %109
  %v111 = vmul.f32 %v50, 0.0051020407
  %v112 = vmul.f32 %v54, 0.0051020407
  %v113 = vmul.f32 %v58, 0.0051020407
  %v114 = vmul.f32 %v62, 0.0051020407
  %v115 = vmul.f32 %v66, 0.0051020407
  %v116 = vmul.f32 %v70, 0.0051020407
  %v117 = vmul.f32 %v74, 0.0051020407
  %v118 = vmul.f32 %v78, 0.0051020407
  %v119 = vmul.f32 %v82, 0.0051020407
  %v120 = vmul.f32 %v86, 0.0051020407
  %v121 = vmul.f32 %v90, 0.0051020407
  %v122 = vmul.f32 %v94, 0.0051020407
  %v123 = vmul.f32 %v98, 0.0051020407
  %v124 = vmul.f32 %v102, 0.0051020407
  %v125 = vmul.f32 %v106, 0.0051020407
  %v126 = vmul.f32 %v110, 0.0051020407
  %v127 = vmul.f32 %v14, %v14
  %v128 = vmul.f32 %v15, %v15
  %v129 = vmul.f32 %v16, %v16
  %v130 = vmul.f32 %v17, %v17
  %v131 = vmul.f32 %v18, %v18
  %v132 = vmul.f32 %v19, %v19
  %v133 = vmul.f32 %v20, %v20
  %v134 = vmul.f32 %v21, %v21
  %v135 = vmul.f32 %v22, %v22
  %v136 = vmul.f32 %v23, %v23
  %v137 = vmul.f32 %v24, %v24
  %v138 = vmul.f32 %v25, %v25
  %v139 = vmul.f32 %v26, %v26
  %v140 = vmul.f32 %v27, %v27
  %v141 = vmul.f32 %v28, %v28
  %v142 = vmul.f32 %v29, %v29
  %v143 = vmul.f32 %v30, %v30
  %v144 = vmul.f32 %v31, %v31
  %v145 = vmul.f32 %v32, %v32
  %v146 = vmul.f32 %v33, %v33
  %v147 = vmul.f32 %v34, %v34
  %v148 = vmul.f32 %v35, %v35
  %v149 = vmul.f32 %v36, %v36
  %v150 = vmul.f32 %v37, %v37
  %v151 = vmul.f32 %v38, %v38
  %v152 = vmul.f32 %v39, %v39
  %v153 = vmul.f32 %v40, %v40
  %v154 = vmul.f32 %v41, %v41
  %v155 = vmul.f32 %v42, %v42
  %v156 = vmul.f32 %v43, %v43
  %v157 = vmul.f32 %v44, %v44
  %v158 = vmul.f32 %v45, %v45
  %v159 = vsel %vm46, %v128, 0.0
  %v160 = vadd.f32 %v127, %v159
  %161 = vadd.xlane.f32.xlu0 %v160
  %v162 = vpop.xlane.xlu0 %161
  %v163 = vsel %vm46, %v130, 0.0
  %v164 = vadd.f32 %v129, %v163
  %165 = vadd.xlane.f32.xlu0 %v164
  %v166 = vpop.xlane.xlu0 %165
  %v167 = vsel %vm46, %v132, 0.0
  %v168 = vadd.f32 %v131, %v167
  %169 = vadd.xlane.f32.xlu0 %v168
  %v170 = vpop.xlane.xlu0 %169
  %v171 = vsel %vm46, %v134, 0.0
  %v172 = vadd.f32 %v133, %v171
  %173 = vadd.xlane.f32.xlu0 %v172
  %v174 = vpop.xlane.xlu0 %173
  %v175 = vsel %vm46, %v136, 0.0
  %v176 = vadd.f32 %v135, %v175
  %177 = vadd.xlane.f32.xlu0 %v176
  %v178 = vpop.xlane.xlu0 %177
  %v179 = vsel %vm46, %v138, 0.0
  %v180 = vadd.f32 %v137, %v179
  %181 = vadd.xlane.f32.xlu0 %v180
  %v182 = vpop.xlane.xlu0 %181
  %v183 = vsel %vm46, %v140, 0.0
  %v184 = vadd.f32 %v139, %v183
  %185 = vadd.xlane.f32.xlu0 %v184
  %v186 = vpop.xlane.xlu0 %185
  %v187 = vsel %vm46, %v142, 0.0
  %v188 = vadd.f32 %v141, %v187
  %189 = vadd.xlane.f32.xlu0 %v188
  %v190 = vpop.xlane.xlu0 %189
  %v191 = vsel %vm46, %v144, 0.0
  %v192 = vadd.f32 %v143, %v191
  %193 = vadd.xlane.f32.xlu0 %v192
  %v194 = vpop.xlane.xlu0 %193
  %v195 = vsel %vm46, %v146, 0.0
  %v196 = vadd.f32 %v145, %v195
  %197 = vadd.xlane.f32.xlu0 %v196
  %v198 = vpop.xlane.xlu0 %197
  %v199 = vsel %vm46, %v148, 0.0
  %v200 = vadd.f32 %v147, %v199
  %201 = vadd.xlane.f32.xlu0 %v200
  %v202 = vpop.xlane.xlu0 %201
  %v203 = vsel %vm46, %v150, 0.0
  %v204 = vadd.f32 %v149, %v203
  %205 = vadd.xlane.f32.xlu0 %v204
  %v206 = vpop.xlane.xlu0 %205
  %v207 = vsel %vm46, %v152, 0.0
  %v208 = vadd.f32 %v151, %v207
  %209 = vadd.xlane.f32.xlu0 %v208
  %v210 = vpop.xlane.xlu0 %209
  %v211 = vsel %vm46, %v154, 0.0
  %v212 = vadd.f32 %v153, %v211
  %213 = vadd.xlane.f32.xlu0 %v212
  %v214 = vpop.xlane.xlu0 %213
  %v215 = vsel %vm46, %v156, 0.0
  %v216 = vadd.f32 %v155, %v215
  %217 = vadd.xlane.f32.xlu0 %v216
  %v218 = vpop.xlane.xlu0 %217
  %v219 = vsel %vm46, %v158, 0.0
  %v220 = vadd.f32 %v157, %v219
  %221 = vadd.xlane.f32.xlu0 %v220
  %v222 = vpop.xlane.xlu0 %221
  %v223 = vmul.f32 %v162, 0.0051020407
  %v224 = vmul.f32 %v166, 0.0051020407
  %v225 = vmul.f32 %v170, 0.0051020407
  %v226 = vmul.f32 %v174, 0.0051020407
  %v227 = vmul.f32 %v178, 0.0051020407
  %v228 = vmul.f32 %v182, 0.0051020407
  %v229 = vmul.f32 %v186, 0.0051020407
  %v230 = vmul.f32 %v190, 0.0051020407
  %v231 = vmul.f32 %v194, 0.0051020407
  %v232 = vmul.f32 %v198, 0.0051020407
  %v233 = vmul.f32 %v202, 0.0051020407
  %v234 = vmul.f32 %v206, 0.0051020407
  %v235 = vmul.f32 %v210, 0.0051020407
  %v236 = vmul.f32 %v214, 0.0051020407
  %v237 = vmul.f32 %v218, 0.0051020407
  %v238 = vmul.f32 %v222, 0.0051020407
  %v239 = vmul.f32 %v111, %v111
  %v240 = vmul.f32 %v112, %v112
  %v241 = vmul.f32 %v113, %v113
  %v242 = vmul.f32 %v114, %v114
  %v243 = vmul.f32 %v115, %v115
  %v244 = vmul.f32 %v116, %v116
  %v245 = vmul.f32 %v117, %v117
  %v246 = vmul.f32 %v118, %v118
  %v247 = vmul.f32 %v119, %v119
  %v248 = vmul.f32 %v120, %v120
  %v249 = vmul.f32 %v121, %v121
  %v250 = vmul.f32 %v122, %v122
  %v251 = vmul.f32 %v123, %v123
  %v252 = vmul.f32 %v124, %v124
  %v253 = vmul.f32 %v125, %v125
  %v254 = vmul.f32 %v126, %v126
  %v255 = vsub.f32 %v223, %v239
  %v256 = vsub.f32 %v224, %v240
  %v257 = vsub.f32 %v225, %v241
  %v258 = vsub.f32 %v226, %v242
  %v259 = vsub.f32 %v227, %v243
  %v260 = vsub.f32 %v228, %v244
  %v261 = vsub.f32 %v229, %v245
  %v262 = vsub.f32 %v230, %v246
  %v263 = vsub.f32 %v231, %v247
  %v264 = vsub.f32 %v232, %v248
  %v265 = vsub.f32 %v233, %v249
  %v266 = vsub.f32 %v234, %v250
  %v267 = vsub.f32 %v235, %v251
  %v268 = vsub.f32 %v236, %v252
  %v269 = vsub.f32 %v237, %v253
  %v270 = vsub.f32 %v238, %v254
  %v271 = vadd.f32 %v255, 1e-05
  %v272 = vadd.f32 %v256, 1e-05
  %v273 = vadd.f32 %v257, 1e-05
  %v274 = vadd.f32 %v258, 1e-05
  %v275 = vadd.f32 %v259, 1e-05
  %v276 = vadd.f32 %v260, 1e-05
  %v277 = vadd.f32 %v261, 1e-05
  %v278 = vadd.f32 %v262, 1e-05
  %v279 = vadd.f32 %v263, 1e-05
  %v280 = vadd.f32 %v264, 1e-05
  %v281 = vadd.f32 %v265, 1e-05
  %v282 = vadd.f32 %v266, 1e-05
  %v283 = vadd.f32 %v267, 1e-05
  %v284 = vadd.f32 %v268, 1e-05
  %v285 = vadd.f32 %v269, 1e-05
  %v286 = vadd.f32 %v270, 1e-05
  %v287 = vrsqrt.pop %v271
  %v288 = vrsqrt.pop %v272
  %v289 = vrsqrt.pop %v273
  %v290 = vrsqrt.pop %v274
  %v291 = vrsqrt.pop %v275
  %v292 = vrsqrt.pop %v276
  %v293 = vrsqrt.pop %v277
  %v294 = vrsqrt.pop %v278
  %v295 = vrsqrt.pop %v279
  %v296 = vrsqrt.pop %v280
  %v297 = vrsqrt.pop %v281
  %v298 = vrsqrt.pop %v282
  %v299 = vrsqrt.pop %v283
  %v300 = vrsqrt.pop %v284
  %v301 = vrsqrt.pop %v285
  %v302 = vrsqrt.pop %v286
  %v303 = vld [vmem:[%s1] sm:$0xff]
  %v304 = vld [vmem:[%s1 + $0x8] sm:$0xff]
  %v305 = vld [vmem:[%s1 + $0x10] sm:$0xff]
  %v306 = vld [vmem:[%s1 + $0x18] sm:$0xff]
  %v307 = vld [vmem:[%s1 + $0x20] sm:$0xff]
  %v308 = vld [vmem:[%s1 + $0x28] sm:$0xff]
  %v309 = vld [vmem:[%s1 + $0x30] sm:$0xff]
  %v310 = vld [vmem:[%s1 + $0x38] sm:$0xff]
  %v311 = vld [vmem:[%s1 + $0x40] sm:$0xff]
  %v312 = vld [vmem:[%s1 + $0x48] sm:$0xff]
  %v313 = vld [vmem:[%s1 + $0x50] sm:$0xff]
  %v314 = vld [vmem:[%s1 + $0x58] sm:$0xff]
  %v315 = vld [vmem:[%s1 + $0x60] sm:$0xff]
  %v316 = vld [vmem:[%s1 + $0x68] sm:$0xff]
  %v317 = vld [vmem:[%s1 + $0x70] sm:$0xff]
  %v318 = vld [vmem:[%s1 + $0x78] sm:$0xff]
  %v319 = vld [vmem:[%s2] sm:$0xff]
  %v320 = vld [vmem:[%s2 + $0x8] sm:$0xff]
  %v321 = vld [vmem:[%s2 + $0x10] sm:$0xff]
  %v322 = vld [vmem:[%s2 + $0x18] sm:$0xff]
  %v323 = vld [vmem:[%s2 + $0x20] sm:$0xff]
  %v324 = vld [vmem:[%s2 + $0x28] sm:$0xff]
  %v325 = vld [vmem:[%s2 + $0x30] sm:$0xff]
  %v326 = vld [vmem:[%s2 + $0x38] sm:$0xff]
  %v327 = vld [vmem:[%s2 + $0x40] sm:$0xff]
  %v328 = vld [vmem:[%s2 + $0x48] sm:$0xff]
  %v329 = vld [vmem:[%s2 + $0x50] sm:$0xff]
  %v330 = vld [vmem:[%s2 + $0x58] sm:$0xff]
  %v331 = vld [vmem:[%s2 + $0x60] sm:$0xff]
  %v332 = vld [vmem:[%s2 + $0x68] sm:$0xff]
  %v333 = vld [vmem:[%s2 + $0x70] sm:$0xff]
  %v334 = vld [vmem:[%s2 + $0x78] sm:$0xff]
  %v335 = vmul.f32 %v287, %v303
  %v336 = vmul.f32 %v288, %v304
  %v337 = vmul.f32 %v289, %v305
  %v338 = vmul.f32 %v290, %v306
  %v339 = vmul.f32 %v291, %v307
  %v340 = vmul.f32 %v292, %v308
  %v341 = vmul.f32 %v293, %v309
  %v342 = vmul.f32 %v294, %v310
  %v343 = vmul.f32 %v295, %v311
  %v344 = vmul.f32 %v296, %v312
  %v345 = vmul.f32 %v297, %v313
  %v346 = vmul.f32 %v298, %v314
  %v347 = vmul.f32 %v299, %v315
  %v348 = vmul.f32 %v300, %v316
  %v349 = vmul.f32 %v301, %v317
  %v350 = vmul.f32 %v302, %v318
  %v351 = vmul.f32 %v111, %v335
  %v352 = vmul.f32 %v112, %v336
  %v353 = vmul.f32 %v113, %v337
  %v354 = vmul.f32 %v114, %v338
  %v355 = vmul.f32 %v115, %v339
  %v356 = vmul.f32 %v116, %v340
  %v357 = vmul.f32 %v117, %v341
  %v358 = vmul.f32 %v118, %v342
  %v359 = vmul.f32 %v119, %v343
  %v360 = vmul.f32 %v120, %v344
  %v361 = vmul.f32 %v121, %v345
  %v362 = vmul.f32 %v122, %v346
  %v363 = vmul.f32 %v123, %v347
  %v364 = vmul.f32 %v124, %v348
  %v365 = vmul.f32 %v125, %v349
  %v366 = vmul.f32 %v126, %v350
  %v367 = vsub.f32 %v319, %v351
  %v368 = vsub.f32 %v320, %v352
  %v369 = vsub.f32 %v321, %v353
  %v370 = vsub.f32 %v322, %v354
  %v371 = vsub.f32 %v323, %v355
  %v372 = vsub.f32 %v324, %v356
  %v373 = vsub.f32 %v325, %v357
  %v374 = vsub.f32 %v326, %v358
  %v375 = vsub.f32 %v327, %v359
  %v376 = vsub.f32 %v328, %v360
  %v377 = vsub.f32 %v329, %v361
  %v378 = vsub.f32 %v330, %v362
  %v379 = vsub.f32 %v331, %v363
  %v380 = vsub.f32 %v332, %v364
  %v381 = vsub.f32 %v333, %v365
  %v382 = vsub.f32 %v334, %v366
  %384 = vset.pattern.permute.xlu0 0
  %385 = vperm.xlu0 %384, %v335
  %v386 = vpop.permute.xlu0 %385
  %389 = vset.pattern.permute.xlu0 0
  %390 = vperm.xlu0 %389, %v336
  %v391 = vpop.permute.xlu0 %390
  %394 = vset.pattern.permute.xlu0 0
  %395 = vperm.xlu0 %394, %v337
  %v396 = vpop.permute.xlu0 %395
  %399 = vset.pattern.permute.xlu0 0
  %400 = vperm.xlu0 %399, %v338
  %v401 = vpop.permute.xlu0 %400
  %404 = vset.pattern.permute.xlu0 0
  %405 = vperm.xlu0 %404, %v339
  %v406 = vpop.permute.xlu0 %405
  %409 = vset.pattern.permute.xlu0 0
  %410 = vperm.xlu0 %409, %v340
  %v411 = vpop.permute.xlu0 %410
  %414 = vset.pattern.permute.xlu0 0
  %415 = vperm.xlu0 %414, %v341
  %v416 = vpop.permute.xlu0 %415
  %419 = vset.pattern.permute.xlu0 0
  %420 = vperm.xlu0 %419, %v342
  %v421 = vpop.permute.xlu0 %420
  %424 = vset.pattern.permute.xlu0 0
  %425 = vperm.xlu0 %424, %v343
  %v426 = vpop.permute.xlu0 %425
  %429 = vset.pattern.permute.xlu0 0
  %430 = vperm.xlu0 %429, %v344
  %v431 = vpop.permute.xlu0 %430
  %434 = vset.pattern.permute.xlu0 0
  %435 = vperm.xlu0 %434, %v345
  %v436 = vpop.permute.xlu0 %435
  %439 = vset.pattern.permute.xlu0 0
  %440 = vperm.xlu0 %439, %v346
  %v441 = vpop.permute.xlu0 %440
  %444 = vset.pattern.permute.xlu0 0
  %445 = vperm.xlu0 %444, %v347
  %v446 = vpop.permute.xlu0 %445
  %449 = vset.pattern.permute.xlu0 0
  %450 = vperm.xlu0 %449, %v348
  %v451 = vpop.permute.xlu0 %450
  %454 = vset.pattern.permute.xlu0 0
  %455 = vperm.xlu0 %454, %v349
  %v456 = vpop.permute.xlu0 %455
  %459 = vset.pattern.permute.xlu0 0
  %460 = vperm.xlu0 %459, %v350
  %v461 = vpop.permute.xlu0 %460
  %v463 = vmul.f32 %v14, %v386
  %v464 = vmul.f32 %v15, %v386
  %v465 = vmul.f32 %v16, %v391
  %v466 = vmul.f32 %v17, %v391
  %v467 = vmul.f32 %v18, %v396
  %v468 = vmul.f32 %v19, %v396
  %v469 = vmul.f32 %v20, %v401
  %v470 = vmul.f32 %v21, %v401
  %v471 = vmul.f32 %v22, %v406
  %v472 = vmul.f32 %v23, %v406
  %v473 = vmul.f32 %v24, %v411
  %v474 = vmul.f32 %v25, %v411
  %v475 = vmul.f32 %v26, %v416
  %v476 = vmul.f32 %v27, %v416
  %v477 = vmul.f32 %v28, %v421
  %v478 = vmul.f32 %v29, %v421
  %v479 = vmul.f32 %v30, %v426
  %v480 = vmul.f32 %v31, %v426
  %v481 = vmul.f32 %v32, %v431
  %v482 = vmul.f32 %v33, %v431
  %v483 = vmul.f32 %v34, %v436
  %v484 = vmul.f32 %v35, %v436
  %v485 = vmul.f32 %v36, %v441
  %v486 = vmul.f32 %v37, %v441
  %v487 = vmul.f32 %v38, %v446
  %v488 = vmul.f32 %v39, %v446
  %v489 = vmul.f32 %v40, %v451
  %v490 = vmul.f32 %v41, %v451
  %v491 = vmul.f32 %v42, %v456
  %v492 = vmul.f32 %v43, %v456
  %v493 = vmul.f32 %v44, %v461
  %v494 = vmul.f32 %v45, %v461
  %496 = vset.pattern.permute.xlu0 0
  %497 = vperm.xlu0 %496, %v367
  %v498 = vpop.permute.xlu0 %497
  %501 = vset.pattern.permute.xlu0 0
  %502 = vperm.xlu0 %501, %v368
  %v503 = vpop.permute.xlu0 %502
  %506 = vset.pattern.permute.xlu0 0
  %507 = vperm.xlu0 %506, %v369
  %v508 = vpop.permute.xlu0 %507
  %511 = vset.pattern.permute.xlu0 0
  %512 = vperm.xlu0 %511, %v370
  %v513 = vpop.permute.xlu0 %512
  %516 = vset.pattern.permute.xlu0 0
  %517 = vperm.xlu0 %516, %v371
  %v518 = vpop.permute.xlu0 %517
  %521 = vset.pattern.permute.xlu0 0
  %522 = vperm.xlu0 %521, %v372
  %v523 = vpop.permute.xlu0 %522
  %526 = vset.pattern.permute.xlu0 0
  %527 = vperm.xlu0 %526, %v373
  %v528 = vpop.permute.xlu0 %527
  %531 = vset.pattern.permute.xlu0 0
  %532 = vperm.xlu0 %531, %v374
  %v533 = vpop.permute.xlu0 %532
  %536 = vset.pattern.permute.xlu0 0
  %537 = vperm.xlu0 %536, %v375
  %v538 = vpop.permute.xlu0 %537
  %541 = vset.pattern.permute.xlu0 0
  %542 = vperm.xlu0 %541, %v376
  %v543 = vpop.permute.xlu0 %542
  %546 = vset.pattern.permute.xlu0 0
  %547 = vperm.xlu0 %546, %v377
  %v548 = vpop.permute.xlu0 %547
  %551 = vset.pattern.permute.xlu0 0
  %552 = vperm.xlu0 %551, %v378
  %v553 = vpop.permute.xlu0 %552
  %556 = vset.pattern.permute.xlu0 0
  %557 = vperm.xlu0 %556, %v379
  %v558 = vpop.permute.xlu0 %557
  %561 = vset.pattern.permute.xlu0 0
  %562 = vperm.xlu0 %561, %v380
  %v563 = vpop.permute.xlu0 %562
  %566 = vset.pattern.permute.xlu0 0
  %567 = vperm.xlu0 %566, %v381
  %v568 = vpop.permute.xlu0 %567
  %571 = vset.pattern.permute.xlu0 0
  %572 = vperm.xlu0 %571, %v382
  %v573 = vpop.permute.xlu0 %572
  %v575 = vadd.f32 %v463, %v498
  %v576 = vadd.f32 %v464, %v498
  %v577 = vadd.f32 %v465, %v503
  %v578 = vadd.f32 %v466, %v503
  %v579 = vadd.f32 %v467, %v508
  %v580 = vadd.f32 %v468, %v508
  %v581 = vadd.f32 %v469, %v513
  %v582 = vadd.f32 %v470, %v513
  %v583 = vadd.f32 %v471, %v518
  %v584 = vadd.f32 %v472, %v518
  %v585 = vadd.f32 %v473, %v523
  %v586 = vadd.f32 %v474, %v523
  %v587 = vadd.f32 %v475, %v528
  %v588 = vadd.f32 %v476, %v528
  %v589 = vadd.f32 %v477, %v533
  %v590 = vadd.f32 %v478, %v533
  %v591 = vadd.f32 %v479, %v538
  %v592 = vadd.f32 %v480, %v538
  %v593 = vadd.f32 %v481, %v543
  %v594 = vadd.f32 %v482, %v543
  %v595 = vadd.f32 %v483, %v548
  %v596 = vadd.f32 %v484, %v548
  %v597 = vadd.f32 %v485, %v553
  %v598 = vadd.f32 %v486, %v553
  %v599 = vadd.f32 %v487, %v558
  %v600 = vadd.f32 %v488, %v558
  %v601 = vadd.f32 %v489, %v563
  %v602 = vadd.f32 %v490, %v563
  %v603 = vadd.f32 %v491, %v568
  %v604 = vadd.f32 %v492, %v568
  %v605 = vadd.f32 %v493, %v573
  %v606 = vadd.f32 %v494, %v573
  %v607 = vmax.f32 %v575, 0.0
  %v608 = vmax.f32 %v576, 0.0
  %v609 = vmax.f32 %v577, 0.0
  %v610 = vmax.f32 %v578, 0.0
  %v611 = vmax.f32 %v579, 0.0
  %v612 = vmax.f32 %v580, 0.0
  %v613 = vmax.f32 %v581, 0.0
  %v614 = vmax.f32 %v582, 0.0
  %v615 = vmax.f32 %v583, 0.0
  %v616 = vmax.f32 %v584, 0.0
  %v617 = vmax.f32 %v585, 0.0
  %v618 = vmax.f32 %v586, 0.0
  %v619 = vmax.f32 %v587, 0.0
  %v620 = vmax.f32 %v588, 0.0
  %v621 = vmax.f32 %v589, 0.0
  %v622 = vmax.f32 %v590, 0.0
  %v623 = vmax.f32 %v591, 0.0
  %v624 = vmax.f32 %v592, 0.0
  %v625 = vmax.f32 %v593, 0.0
  %v626 = vmax.f32 %v594, 0.0
  %v627 = vmax.f32 %v595, 0.0
  %v628 = vmax.f32 %v596, 0.0
  %v629 = vmax.f32 %v597, 0.0
  %v630 = vmax.f32 %v598, 0.0
  %v631 = vmax.f32 %v599, 0.0
  %v632 = vmax.f32 %v600, 0.0
  %v633 = vmax.f32 %v601, 0.0
  %v634 = vmax.f32 %v602, 0.0
  %v635 = vmax.f32 %v603, 0.0
  %v636 = vmax.f32 %v604, 0.0
  %v637 = vmax.f32 %v605, 0.0
  %v638 = vmax.f32 %v606, 0.0
  %639 = vst [vmem:[%s3] sm:$0xff] %v607
  %640 = vst.msk [vmem:[%s3 + $0x8] sm:$0xff] %vm46, %v608
  %641 = vst [vmem:[%s3 + $0x10] sm:$0xff] %v609
  %642 = vst.msk [vmem:[%s3 + $0x18] sm:$0xff] %vm46, %v610
  %643 = vst [vmem:[%s3 + $0x20] sm:$0xff] %v611
  %644 = vst.msk [vmem:[%s3 + $0x28] sm:$0xff] %vm46, %v612
  %645 = vst [vmem:[%s3 + $0x30] sm:$0xff] %v613
  %646 = vst.msk [vmem:[%s3 + $0x38] sm:$0xff] %vm46, %v614
  %647 = vst [vmem:[%s3 + $0x40] sm:$0xff] %v615
  %648 = vst.msk [vmem:[%s3 + $0x48] sm:$0xff] %vm46, %v616
  %649 = vst [vmem:[%s3 + $0x50] sm:$0xff] %v617
  %650 = vst.msk [vmem:[%s3 + $0x58] sm:$0xff] %vm46, %v618
  %651 = vst [vmem:[%s3 + $0x60] sm:$0xff] %v619
  %652 = vst.msk [vmem:[%s3 + $0x68] sm:$0xff] %vm46, %v620
  %653 = vst [vmem:[%s3 + $0x70] sm:$0xff] %v621
  %654 = vst.msk [vmem:[%s3 + $0x78] sm:$0xff] %vm46, %v622
  %655 = vst [vmem:[%s3 + $0x80] sm:$0xff] %v623
  %656 = vst.msk [vmem:[%s3 + $0x88] sm:$0xff] %vm46, %v624
  %657 = vst [vmem:[%s3 + $0x90] sm:$0xff] %v625
  %658 = vst.msk [vmem:[%s3 + $0x98] sm:$0xff] %vm46, %v626
  %659 = vst [vmem:[%s3 + $0xa0] sm:$0xff] %v627
  %660 = vst.msk [vmem:[%s3 + $0xa8] sm:$0xff] %vm46, %v628
  %661 = vst [vmem:[%s3 + $0xb0] sm:$0xff] %v629
  %662 = vst.msk [vmem:[%s3 + $0xb8] sm:$0xff] %vm46, %v630
  %663 = vst [vmem:[%s3 + $0xc0] sm:$0xff] %v631
  %664 = vst.msk [vmem:[%s3 + $0xc8] sm:$0xff] %vm46, %v632
  %665 = vst [vmem:[%s3 + $0xd0] sm:$0xff] %v633
  %666 = vst.msk [vmem:[%s3 + $0xd8] sm:$0xff] %vm46, %v634
  %667 = vst [vmem:[%s3 + $0xe0] sm:$0xff] %v635
  %668 = vst.msk [vmem:[%s3 + $0xe8] sm:$0xff] %vm46, %v636
  %669 = vst [vmem:[%s3 + $0xf0] sm:$0xff] %v637
  %670 = vst.msk [vmem:[%s3 + $0xf8] sm:$0xff] %vm46, %v638
  // Predicated region
  $region14: #{tpu_custom_call.1} parent=0 // pred_check
    _
  $region15: #{tpu_custom_call.1} parent=0 // pred_check_branch
    %672 = sbr.rel (0) target = $region17
  $region16: #{tpu_custom_call.1} parent=0 // pred_region
    _
  $region17: #{tpu_custom_call.1} parent=0 // pred_fallthru
    _
  // Predicated region
  $region18: #{tpu_custom_call.1} parent=0 // pred_check
    _
  $region19: #{tpu_custom_call.1} parent=0 // pred_check_branch
    %674 = sbr.rel (0) target = $region21
  $region20: #{tpu_custom_call.1} parent=0 // pred_region
    _
  $region21: #{tpu_custom_call.1} parent=0 // pred_fallthru
    _

</llo_original>
